<compile_context>
chip_gen: v6e
topology: v6e:2x2x1
jax: 0.10.0
libtpu: 0.0.40
codegen_flags: <defaults>
</compile_context>

<pallas_src>
import functools
import math

import jax
import jax.numpy as jnp
import numpy as np
from jax.experimental import pallas as pl
from jax.experimental.pallas import tpu as pltpu

NORM_EPS = 1e-12          # typical BERT-style norm_eps
_INV_SQRT2 = 1.0 / math.sqrt(2.0)
_DEN_FLOOR = 1e-9         # guard: fully-masked row would otherwise be 0/0 -> NaN


def _validator_head_kernel(hs_ref, mask_ref, wd_ref, bd_ref, gamma_ref,
                           beta_ref, wc_ref, bc_ref,
                           pooled_ref, logits_ref,
                           num_acc, den_acc, *, bf16_mask_mul):
    """grid = (batch tiles, sequence tiles); sequence axis is a reduction."""
    s = pl.program_id(1)

    @pl.when(s == 0)
    def _init():
        num_acc[...] = jnp.zeros_like(num_acc)
        den_acc[...] = jnp.zeros_like(den_acc)

    # ---- masked-sum accumulation (HBM-bandwidth-bound streaming phase) -----
    m = mask_ref[...]                                       # (TB, TS, 1) bf16 {0,1}
    if bf16_mask_mul:
        # v6e/v7x: packed bf16 VPU multiply (exact, mask is 0/1); the f32
        # upcast happens only inside the axis=1 reduction (dtype=f32), so no
        # (TB,TS,H) f32 temp is materialized and the VALU stays under 4 slots.
        hm = hs_ref[...] * m                                # native dtype (bf16)
        num_acc[...] += jnp.sum(hm, axis=1, dtype=jnp.float32)   # (TB, H)
    else:
        # v5e: no bf16 VPU; kernel is HBM-bound there with ample VALU slack.
        num_acc[...] += jnp.sum(hs_ref[...].astype(jnp.float32)
                                * m.astype(jnp.float32), axis=1)
    den_acc[...] += jnp.sum(m.astype(jnp.float32), axis=1)  # (TB, 1)

    # ---- finalize: mean pool -> dense -> GELU -> LayerNorm -> classifier ----
    @pl.when(s == pl.num_programs(1) - 1)
    def _finalize():
        den = jnp.maximum(den_acc[...], _DEN_FLOOR)         # fully-masked-row guard
        pooling = num_acc[...] * pl.reciprocal(den)         # (TB, H) f32

        # dense (H -> H): bf16 MXU fast path, f32 accumulation
        x = jnp.dot(pooling.astype(wd_ref.dtype), wd_ref[...],
                    preferred_element_type=jnp.float32)
        x = x + bd_ref[...]

        # exact erf-based GELU (matches torch.nn.functional.gelu default)
        x = 0.5 * x * (1.0 + jax.lax.erf(x * _INV_SQRT2))

        # LayerNorm over the hidden dim (kept in f32; v5e has no bf16 VPU/EUP)
        mean = jnp.mean(x, axis=-1, keepdims=True)
        var = jnp.mean((x - mean) ** 2, axis=-1, keepdims=True)
        y = (x - mean) * jax.lax.rsqrt(var + NORM_EPS)
        y = y * gamma_ref[...] + beta_ref[...]

        # TODO(synk): Dropout(classifier_dropout) is identity at inference; no RNG applied.
        pooled_ref[...] = y

        # classifier (H -> 1): VPU multiply + lane reduction instead of an
        # N=1 MXU matmul (which would use a single result lane).
        logits_ref[...] = (jnp.sum(y * wc_ref[...], axis=-1, keepdims=True)
                           + bc_ref[...])


def _tpu_info():
    try:
        return pltpu.get_tpu_info()
    except Exception:
        return None


def _vmem_limit_bytes():
    """Per-generation VMEM limit: ~100 MiB on 128-MiB chips (v5e/v6e),
    ~51 MiB on 64-MiB v7x, leaving headroom for Mosaic internal scratch."""
    cap = 128 << 20
    info = _tpu_info()
    if info is not None:
        cap = int(getattr(info, "vmem_capacity_bytes", cap))
    return min(int(cap * 0.80), 100 << 20)


def _bf16_vpu_available():
    """v6e/v7x VPUs handle bf16; v5e does not (keep f32 path there)."""
    try:
        kind = jax.devices()[0].device_kind.lower()
    except Exception:
        return True
    return "v5" not in kind


def _pick_tiles(B, S, H, itemsize, vmem_limit):
    """Batch tile: prefer >=2 sublane-aligned (multiple-of-8) tiles so the
    'parallel' axis can be split across v7x's two TensorCores; otherwise the
    whole batch (keeps the (8,128) block constraint trivially satisfied).
    Sequence tile: biggest block (multiple of 128, divisor of S) such that the
    double-buffered hidden-state block plus intermediates and resident weights
    stay comfortably inside the per-chip VMEM limit (~12-16 MiB per block)."""
    tb = 8 if (B % 8 == 0 and B >= 16) else B
    target_bytes = min(16 << 20, vmem_limit // 6)
    ts = S
    while tb * ts * H * itemsize > target_bytes and ts % 256 == 0:
        ts //= 2
    return tb, ts


def validator_head(last_hidden_state, attention_mask, params):
    """Runs the Pallas kernel; returns (pooled_output [B,H], cls_logits [B])."""
    B, S, H = last_hidden_state.shape

    wd = params["dense_w"]                                        # [H, H] bf16
    bd = params["dense_b"].reshape(1, H).astype(jnp.float32)
    gamma = params["norm_gamma"].reshape(1, H).astype(jnp.float32)
    beta = params["norm_beta"].reshape(1, H).astype(jnp.float32)
    wc = params["cls_w"].reshape(1, H).astype(jnp.float32)        # classifier row
    bc = params["cls_b"].reshape(1, 1).astype(jnp.float32)
    # (B, S, 1) bf16 mask: same sublane/lane layout as the hidden-state tile
    # (TS on sublanes, stride-0 lane broadcast) and 2 bytes/elem HBM traffic.
    mask = attention_mask.reshape(B, S, 1).astype(jnp.bfloat16)

    vmem_limit = _vmem_limit_bytes()
    tb, ts = _pick_tiles(B, S, H, last_hidden_state.dtype.itemsize, vmem_limit)
    grid = (B // tb, S // ts)

    hs_spec = pl.BlockSpec((tb, ts, H), lambda b, s: (b, s, 0))
    mask_spec = pl.BlockSpec((tb, ts, 1), lambda b, s: (b, s, 0))
    wd_spec = pl.BlockSpec((H, H), lambda b, s: (0, 0))     # resident weight
    row_spec = pl.BlockSpec((1, H), lambda b, s: (0, 0))
    bc_spec = pl.BlockSpec((1, 1), lambda b, s: (0, 0))
    pooled_spec = pl.BlockSpec((tb, H), lambda b, s: (b, 0))
    logits_spec = pl.BlockSpec((tb, 1), lambda b, s: (b, 0))

    kernel = functools.partial(_validator_head_kernel,
                               bf16_mask_mul=_bf16_vpu_available())

    pooled, logits = pl.pallas_call(
        kernel,
        out_shape=(
            jax.ShapeDtypeStruct((B, H), jnp.float32),
            jax.ShapeDtypeStruct((B, 1), jnp.float32),
        ),
        grid_spec=pltpu.PrefetchScalarGridSpec(
            num_scalar_prefetch=0,
            grid=grid,
            in_specs=[hs_spec, mask_spec, wd_spec, row_spec, row_spec,
                      row_spec, row_spec, bc_spec],
            out_specs=(pooled_spec, logits_spec),
            scratch_shapes=[pltpu.VMEM((tb, H), jnp.float32),
                            pltpu.VMEM((tb, 1), jnp.float32)]),
        compiler_params=pltpu.CompilerParams(
            dimension_semantics=("parallel", "arbitrary"),
            vmem_limit_bytes=vmem_limit),
    )(last_hidden_state, mask, wd, bd, gamma, beta, wc, bc)
    return pooled, logits[:, 0]


def bce_with_logits_loss(logits, labels):
    # mean( max(z,0) - z*y + log(1 + exp(-|z|)) ), matching nn.BCEWithLogitsLoss
    z = logits.astype(jnp.float32)
    y = labels.astype(jnp.float32)
    return jnp.mean(jnp.maximum(z, 0.0) - z * y + jnp.log1p(jnp.exp(-jnp.abs(z))))


def validator_forward(last_hidden_state, attention_mask, params, labels=None):
    pooled, cls_logits = validator_head(last_hidden_state, attention_mask, params)
    loss = None
    if labels is not None:
        loss = bce_with_logits_loss(cls_logits, labels)
    return {"pooler_output": pooled, "loss": loss, "logits": cls_logits}


def init_params(key, hidden_size):
    k1, k2, k3, k4 = jax.random.split(key, 4)
    scale = 1.0 / math.sqrt(hidden_size)
    return {
        # dense weight pre-transposed to [in, out] and stored bf16 (MXU fast
        # path, halved resident VMEM/DMA); accumulation stays f32 in-kernel.
        "dense_w": (jax.random.normal(k1, (hidden_size, hidden_size), jnp.float32)
                    * scale).astype(jnp.bfloat16),
        "dense_b": jax.random.normal(k2, (hidden_size,), jnp.float32) * 0.01,
        "norm_gamma": jnp.ones((hidden_size,), jnp.float32),
        "norm_beta": jnp.zeros((hidden_size,), jnp.float32),
        "cls_w": jax.random.normal(k3, (hidden_size, 1), jnp.float32) * scale,
        "cls_b": jax.random.normal(k4, (1,), jnp.float32) * 0.01,
    }


def _reference_head(last_hidden_state, attention_mask, params):
    """Pure-JAX reference of the same head (sanity check)."""
    h = last_hidden_state.astype(jnp.float32)
    m = attention_mask.astype(jnp.float32)
    num = jnp.sum(h * m[:, :, None], axis=1)
    den = jnp.maximum(jnp.sum(m, axis=1, keepdims=True), _DEN_FLOOR)
    pooling = num / den
    wd = params["dense_w"]
    x = jnp.dot(pooling.astype(wd.dtype), wd,
                preferred_element_type=jnp.float32) + params["dense_b"]
    x = 0.5 * x * (1.0 + jax.lax.erf(x * _INV_SQRT2))
    mean = jnp.mean(x, axis=-1, keepdims=True)
    var = jnp.mean((x - mean) ** 2, axis=-1, keepdims=True)
    y = (x - mean) * jax.lax.rsqrt(var + NORM_EPS)
    y = y * params["norm_gamma"] + params["norm_beta"]
    logits = y @ params["cls_w"].astype(jnp.float32) + params["cls_b"]
    return y, logits[:, 0]


if __name__ == "__main__":
    B, S, H = 2, 8, 32
    key = jax.random.PRNGKey(0)
    k_hs, k_params, k_lbl = jax.random.split(key, 3)

    # synthetic "encoder output" in its native bf16 dtype + mask + labels
    last_hidden_state = jax.random.normal(
        k_hs, (B, S, H), jnp.float32).astype(jnp.bfloat16)
    attention_mask = jnp.ones((B, S), jnp.float32).at[1, 6:].set(0.0)
    labels = jax.random.bernoulli(k_lbl, 0.5, (B,)).astype(jnp.float32)

    params = init_params(k_params, H)

    out = validator_forward(last_hidden_state, attention_mask, params, labels=labels)
    jax.block_until_ready(out["pooler_output"])
    jax.block_until_ready(out["logits"])
    jax.block_until_ready(out["loss"])

    assert out["pooler_output"].shape == (B, H)
    assert out["logits"].shape == (B,)

    ref_pooled, ref_logits = _reference_head(last_hidden_state, attention_mask, params)
    assert np.allclose(np.asarray(out["pooler_output"]), np.asarray(ref_pooled),
                       atol=2e-2, rtol=2e-2)
    assert np.allclose(np.asarray(out["logits"]), np.asarray(ref_logits),
                       atol=2e-2, rtol=2e-2)
    print("KERNEL_OK")
</pallas_src>

<mosaic_0001>
module attributes {stable_mosaic.version = 11 : i64} {
  func.func @_validator_head_kernel(%arg0: i32, %arg1: i32, %arg2: memref<2x8x32xbf16, #tpu.memory_space<vmem>>, %arg3: memref<2x8x1xbf16, #tpu.memory_space<vmem>>, %arg4: memref<32x32xbf16, #tpu.memory_space<vmem>>, %arg5: memref<1x32xf32, #tpu.memory_space<vmem>>, %arg6: memref<1x32xf32, #tpu.memory_space<vmem>>, %arg7: memref<1x32xf32, #tpu.memory_space<vmem>>, %arg8: memref<1x32xf32, #tpu.memory_space<vmem>>, %arg9: memref<1x1xf32, #tpu.memory_space<vmem>>, %arg10: memref<2x32xf32, #tpu.memory_space<vmem>>, %arg11: memref<2x1xf32, #tpu.memory_space<vmem>>, %arg12: memref<2x32xf32, #tpu.memory_space<vmem>>, %arg13: memref<2x1xf32, #tpu.memory_space<vmem>>) attributes {dimension_semantics = [#tpu.dimension_semantics<parallel>, #tpu.dimension_semantics<arbitrary>], iteration_bounds = array<i64: 1, 1>, scalar_prefetch = 0 : i64, scratch_operands = 2 : i64, tpu.core_type = #tpu.core_type<tc>, window_params = [{transform_indices = @transform_0, window_bounds = array<i64: 2, 8, 32>}, {transform_indices = @transform_1, window_bounds = array<i64: 2, 8, 1>}, {pipeline_mode = #tpu.pipeline_mode<synchronous>, transform_indices = @transform_2, window_bounds = array<i64: 32, 32>}, {pipeline_mode = #tpu.pipeline_mode<synchronous>, transform_indices = @transform_3, window_bounds = array<i64: 1, 32>}, {pipeline_mode = #tpu.pipeline_mode<synchronous>, transform_indices = @transform_4, window_bounds = array<i64: 1, 32>}, {pipeline_mode = #tpu.pipeline_mode<synchronous>, transform_indices = @transform_5, window_bounds = array<i64: 1, 32>}, {pipeline_mode = #tpu.pipeline_mode<synchronous>, transform_indices = @transform_6, window_bounds = array<i64: 1, 32>}, {pipeline_mode = #tpu.pipeline_mode<synchronous>, transform_indices = @transform_7, window_bounds = array<i64: 1, 1>}, {transform_indices = @transform_8, window_bounds = array<i64: 2, 32>}, {transform_indices = @transform_9, window_bounds = array<i64: 2, 1>}]} {
    %c0_i32 = arith.constant 0 : i32
    %0 = arith.cmpi eq, %arg1, %c0_i32 : i32
    %1 = arith.extui %0 : i1 to i32
    %c0_i32_0 = arith.constant 0 : i32
    %2 = arith.cmpi ne, %1, %c0_i32_0 : i32
    scf.if %2 {
      %cst_17 = arith.constant 0.000000e+00 : f32
      %20 = vector.broadcast %cst_17 : f32 to vector<2x32xf32>
      %c0_18 = arith.constant 0 : index
      %c0_19 = arith.constant 0 : index
      %21 = vector.load %arg12[%c0_18, %c0_19] : memref<2x32xf32, #tpu.memory_space<vmem>>, vector<2x32xf32>
      tpu.vector_store %arg12[%c0_18, %c0_19], %20 {strides = array<i32>} : memref<2x32xf32, #tpu.memory_space<vmem>>, vector<2x32xf32>,
      %cst_20 = arith.constant 0.000000e+00 : f32
      %22 = vector.broadcast %cst_20 : f32 to vector<2x1xf32>
      %c0_21 = arith.constant 0 : index
      %c0_22 = arith.constant 0 : index
      %23 = vector.load %arg13[%c0_21, %c0_22] : memref<2x1xf32, #tpu.memory_space<vmem>>, vector<2x1xf32>
      tpu.vector_store %arg13[%c0_21, %c0_22], %22 {strides = array<i32>} : memref<2x1xf32, #tpu.memory_space<vmem>>, vector<2x1xf32>,
    } else {
    }
    %c0 = arith.constant 0 : index
    %c0_1 = arith.constant 0 : index
    %c0_2 = arith.constant 0 : index
    %3 = vector.load %arg3[%c0, %c0_1, %c0_2] : memref<2x8x1xbf16, #tpu.memory_space<vmem>>, vector<2x8x1xbf16>
    %c0_3 = arith.constant 0 : index
    %c0_4 = arith.constant 0 : index
    %c0_5 = arith.constant 0 : index
    %4 = vector.load %arg2[%c0_3, %c0_4, %c0_5] : memref<2x8x32xbf16, #tpu.memory_space<vmem>>, vector<2x8x32xbf16>
    %5 = vector.broadcast %3 : vector<2x8x1xbf16> to vector<2x8x32xbf16>
    %6 = arith.mulf %4, %5 : vector<2x8x32xbf16>
    %c0_6 = arith.constant 0 : index
    %c0_7 = arith.constant 0 : index
    %7 = vector.load %arg12[%c0_6, %c0_7] : memref<2x32xf32, #tpu.memory_space<vmem>>, vector<2x32xf32>
    %8 = arith.extf %6 : vector<2x8x32xbf16> to vector<2x8x32xf32>
    %cst = arith.constant dense<0.000000e+00> : vector<2x32xf32>
    %9 = vector.multi_reduction <add>, %8, %cst [1] : vector<2x8x32xf32> to vector<2x32xf32>
    %10 = arith.addf %7, %9 : vector<2x32xf32>
    %c0_8 = arith.constant 0 : index
    %c0_9 = arith.constant 0 : index
    %11 = vector.load %arg12[%c0_8, %c0_9] : memref<2x32xf32, #tpu.memory_space<vmem>>, vector<2x32xf32>
    tpu.vector_store %arg12[%c0_8, %c0_9], %10 {strides = array<i32>} : memref<2x32xf32, #tpu.memory_space<vmem>>, vector<2x32xf32>,
    %c0_10 = arith.constant 0 : index
    %c0_11 = arith.constant 0 : index
    %12 = vector.load %arg13[%c0_10, %c0_11] : memref<2x1xf32, #tpu.memory_space<vmem>>, vector<2x1xf32>
    %13 = arith.extf %3 : vector<2x8x1xbf16> to vector<2x8x1xf32>
    %cst_12 = arith.constant dense<0.000000e+00> : vector<2x1xf32>
    %14 = vector.multi_reduction <add>, %13, %cst_12 [1] : vector<2x8x1xf32> to vector<2x1xf32>
    %15 = arith.addf %12, %14 : vector<2x1xf32>
    %c0_13 = arith.constant 0 : index
    %c0_14 = arith.constant 0 : index
    %16 = vector.load %arg13[%c0_13, %c0_14] : memref<2x1xf32, #tpu.memory_space<vmem>>, vector<2x1xf32>
    tpu.vector_store %arg13[%c0_13, %c0_14], %15 {strides = array<i32>} : memref<2x1xf32, #tpu.memory_space<vmem>>, vector<2x1xf32>,
    %c0_i32_15 = arith.constant 0 : i32
    %17 = arith.cmpi eq, %arg1, %c0_i32_15 : i32
    %18 = arith.extui %17 : i1 to i32
    %c0_i32_16 = arith.constant 0 : i32
    %19 = arith.cmpi ne, %18, %c0_i32_16 : i32
    scf.if %19 {
      %c0_17 = arith.constant 0 : index
      %c0_18 = arith.constant 0 : index
      %20 = vector.load %arg13[%c0_17, %c0_18] : memref<2x1xf32, #tpu.memory_space<vmem>>, vector<2x1xf32>
      %cst_19 = arith.constant 9.99999971E-10 : f32
      %21 = vector.broadcast %cst_19 : f32 to vector<2x1xf32>
      %22 = arith.maximumf %20, %21 : vector<2x1xf32>
      %c0_20 = arith.constant 0 : index
      %c0_21 = arith.constant 0 : index
      %23 = vector.load %arg12[%c0_20, %c0_21] : memref<2x32xf32, #tpu.memory_space<vmem>>, vector<2x32xf32>
      %24 = tpu.reciprocal %22 : vector<2x1xf32> -> vector<2x1xf32>
      %25 = vector.broadcast %24 : vector<2x1xf32> to vector<2x32xf32>
      %26 = arith.mulf %23, %25 : vector<2x32xf32>
      %27 = arith.truncf %26 : vector<2x32xf32> to vector<2x32xbf16>
      %c0_22 = arith.constant 0 : index
      %c0_23 = arith.constant 0 : index
      %28 = vector.load %arg4[%c0_22, %c0_23] : memref<32x32xbf16, #tpu.memory_space<vmem>>, vector<32x32xbf16>
      %cst_24 = arith.constant dense<0.000000e+00> : vector<2x32xf32>
      %29 = tpu.matmul %27, %28, %cst_24 {dimension_numbers = #tpu.dot_dimension_numbers<[1], [0], [0], [1], [0, 0, 1, 1], [], []>} : vector<2x32xbf16>, vector<32x32xbf16>, vector<2x32xf32> -> vector<2x32xf32>
      %c0_25 = arith.constant 0 : index
      %c0_26 = arith.constant 0 : index
      %30 = vector.load %arg5[%c0_25, %c0_26] : memref<1x32xf32, #tpu.memory_space<vmem>>, vector<1x32xf32>
      %31 = vector.broadcast %30 : vector<1x32xf32> to vector<2x32xf32>
      %32 = arith.addf %29, %31 : vector<2x32xf32>
      %cst_27 = arith.constant 5.000000e-01 : f32
      %33 = vector.broadcast %cst_27 : f32 to vector<2x32xf32>
      %34 = arith.mulf %33, %32 : vector<2x32xf32>
      %cst_28 = arith.constant 0.707106769 : f32
      %35 = vector.broadcast %cst_28 : f32 to vector<2x32xf32>
      %36 = arith.mulf %32, %35 : vector<2x32xf32>
      %37 = math.erf %36 : vector<2x32xf32>
      %cst_29 = arith.constant 1.000000e+00 : f32
      %38 = vector.broadcast %cst_29 : f32 to vector<2x32xf32>
      %39 = arith.addf %38, %37 : vector<2x32xf32>
      %40 = arith.mulf %34, %39 : vector<2x32xf32>
      %cst_30 = arith.constant dense<0.000000e+00> : vector<2xf32>
      %41 = vector.multi_reduction <add>, %40, %cst_30 [1] : vector<2x32xf32> to vector<2xf32>
      %42 = vector.shape_cast %41 : vector<2xf32> to vector<2x1xf32>
      %cst_31 = arith.constant 3.200000e+01 : f32
      %43 = vector.broadcast %cst_31 : f32 to vector<2x1xf32>
      %44 = arith.divf %42, %43 : vector<2x1xf32>
      %45 = vector.broadcast %44 : vector<2x1xf32> to vector<2x32xf32>
      %46 = arith.subf %40, %45 : vector<2x32xf32>
      %47 = arith.mulf %46, %46 : vector<2x32xf32>
      %cst_32 = arith.constant dense<0.000000e+00> : vector<2xf32>
      %48 = vector.multi_reduction <add>, %47, %cst_32 [1] : vector<2x32xf32> to vector<2xf32>
      %49 = vector.shape_cast %48 : vector<2xf32> to vector<2x1xf32>
      %cst_33 = arith.constant 3.200000e+01 : f32
      %50 = vector.broadcast %cst_33 : f32 to vector<2x1xf32>
      %51 = arith.divf %49, %50 : vector<2x1xf32>
      %52 = vector.broadcast %44 : vector<2x1xf32> to vector<2x32xf32>
      %53 = arith.subf %40, %52 : vector<2x32xf32>
      %cst_34 = arith.constant 9.99999996E-13 : f32
      %54 = vector.broadcast %cst_34 : f32 to vector<2x1xf32>
      %55 = arith.addf %51, %54 : vector<2x1xf32>
      %56 = math.rsqrt %55 : vector<2x1xf32>
      %57 = vector.broadcast %56 : vector<2x1xf32> to vector<2x32xf32>
      %58 = arith.mulf %53, %57 : vector<2x32xf32>
      %c0_35 = arith.constant 0 : index
      %c0_36 = arith.constant 0 : index
      %59 = vector.load %arg6[%c0_35, %c0_36] : memref<1x32xf32, #tpu.memory_space<vmem>>, vector<1x32xf32>
      %60 = vector.broadcast %59 : vector<1x32xf32> to vector<2x32xf32>
      %61 = arith.mulf %58, %60 : vector<2x32xf32>
      %c0_37 = arith.constant 0 : index
      %c0_38 = arith.constant 0 : index
      %62 = vector.load %arg7[%c0_37, %c0_38] : memref<1x32xf32, #tpu.memory_space<vmem>>, vector<1x32xf32>
      %63 = vector.broadcast %62 : vector<1x32xf32> to vector<2x32xf32>
      %64 = arith.addf %61, %63 : vector<2x32xf32>
      %c0_39 = arith.constant 0 : index
      %c0_40 = arith.constant 0 : index
      %65 = vector.load %arg10[%c0_39, %c0_40] : memref<2x32xf32, #tpu.memory_space<vmem>>, vector<2x32xf32>
      tpu.vector_store %arg10[%c0_39, %c0_40], %64 {strides = array<i32>} : memref<2x32xf32, #tpu.memory_space<vmem>>, vector<2x32xf32>,
      %c0_41 = arith.constant 0 : index
      %c0_42 = arith.constant 0 : index
      %66 = vector.load %arg8[%c0_41, %c0_42] : memref<1x32xf32, #tpu.memory_space<vmem>>, vector<1x32xf32>
      %67 = vector.broadcast %66 : vector<1x32xf32> to vector<2x32xf32>
      %68 = arith.mulf %64, %67 : vector<2x32xf32>
      %cst_43 = arith.constant dense<0.000000e+00> : vector<2xf32>
      %69 = vector.multi_reduction <add>, %68, %cst_43 [1] : vector<2x32xf32> to vector<2xf32>
      %70 = vector.shape_cast %69 : vector<2xf32> to vector<2x1xf32>
      %c0_44 = arith.constant 0 : index
      %c0_45 = arith.constant 0 : index
      %71 = vector.load %arg9[%c0_44, %c0_45] : memref<1x1xf32, #tpu.memory_space<vmem>>, vector<1x1xf32>
      %72 = vector.broadcast %71 : vector<1x1xf32> to vector<2x1xf32>
      %73 = arith.addf %70, %72 : vector<2x1xf32>
      %c0_46 = arith.constant 0 : index
      %c0_47 = arith.constant 0 : index
      %74 = vector.load %arg11[%c0_46, %c0_47] : memref<2x1xf32, #tpu.memory_space<vmem>>, vector<2x1xf32>
      tpu.vector_store %arg11[%c0_46, %c0_47], %73 {strides = array<i32>} : memref<2x1xf32, #tpu.memory_space<vmem>>, vector<2x1xf32>,
    } else {
    }
    return
  }
  func.func @transform_0(%arg0: i32, %arg1: i32) -> (i32, i32, i32) {
    %c0_i32 = arith.constant 0 : i32
    %c0_i32_0 = arith.constant 0 : i32
    return %arg0, %arg1, %c0_i32 : i32, i32, i32
  }
  func.func @transform_1(%arg0: i32, %arg1: i32) -> (i32, i32, i32) {
    %c0_i32 = arith.constant 0 : i32
    %c0_i32_0 = arith.constant 0 : i32
    return %arg0, %arg1, %c0_i32 : i32, i32, i32
  }
  func.func @transform_2(%arg0: i32, %arg1: i32) -> (i32, i32) {
    %c0_i32 = arith.constant 0 : i32
    %c0_i32_0 = arith.constant 0 : i32
    %c0_i32_1 = arith.constant 0 : i32
    return %c0_i32, %c0_i32_0 : i32, i32
  }
  func.func @transform_3(%arg0: i32, %arg1: i32) -> (i32, i32) {
    %c0_i32 = arith.constant 0 : i32
    %c0_i32_0 = arith.constant 0 : i32
    %c0_i32_1 = arith.constant 0 : i32
    return %c0_i32, %c0_i32_0 : i32, i32
  }
  func.func @transform_4(%arg0: i32, %arg1: i32) -> (i32, i32) {
    %c0_i32 = arith.constant 0 : i32
    %c0_i32_0 = arith.constant 0 : i32
    %c0_i32_1 = arith.constant 0 : i32
    return %c0_i32, %c0_i32_0 : i32, i32
  }
  func.func @transform_5(%arg0: i32, %arg1: i32) -> (i32, i32) {
    %c0_i32 = arith.constant 0 : i32
    %c0_i32_0 = arith.constant 0 : i32
    %c0_i32_1 = arith.constant 0 : i32
    return %c0_i32, %c0_i32_0 : i32, i32
  }
  func.func @transform_6(%arg0: i32, %arg1: i32) -> (i32, i32) {
    %c0_i32 = arith.constant 0 : i32
    %c0_i32_0 = arith.constant 0 : i32
    %c0_i32_1 = arith.constant 0 : i32
    return %c0_i32, %c0_i32_0 : i32, i32
  }
  func.func @transform_7(%arg0: i32, %arg1: i32) -> (i32, i32) {
    %c0_i32 = arith.constant 0 : i32
    %c0_i32_0 = arith.constant 0 : i32
    %c0_i32_1 = arith.constant 0 : i32
    return %c0_i32, %c0_i32_0 : i32, i32
  }
  func.func @transform_8(%arg0: i32, %arg1: i32) -> (i32, i32) {
    %c0_i32 = arith.constant 0 : i32
    %c0_i32_0 = arith.constant 0 : i32
    return %arg0, %c0_i32 : i32, i32
  }
  func.func @transform_9(%arg0: i32, %arg1: i32) -> (i32, i32) {
    %c0_i32 = arith.constant 0 : i32
    %c0_i32_0 = arith.constant 0 : i32
    return %arg0, %c0_i32 : i32, i32
  }
}

</mosaic_0001>

<llo_original>
// kernel: tpu_custom_call.1
$region0: #{tpu_custom_call.1}
  #allocation0 [shape = 'u32[]', space=smem, size = 0x4, offset = 0x4, fixed_abs, tag = 'smem constant byte address 0x4 - core index']
  #allocation1 [shape = 'u32[144,128]{1,0:T(1,128)}', space=vmem, size = 0x12000, scoped, tag = 'internal scratch']
  #allocation2 [shape = 'f32[2,32]{1,0:T(2,128)}', space=vmem, size = 0x400, scoped, tag = 'scratch operand']
  #allocation3 [shape = 'f32[2,1]{1,0:T(2,128)}', space=vmem, size = 0x400, scoped, tag = 'scratch operand']
  #allocation4 [shape = 'f32[1,1]{1,0:T(1,128)S(1)}', space=vmem, size = 0x200, scoped, tag = 'scoped memory for tpu_custom_call.1']
  %s0 = inlined_call_operand.vmem [shape: bf16[2,8,32], index: 0, kind: input, shape index: {}]
  %s1 = inlined_call_operand.vmem [shape: bf16[2,8,1], index: 1, kind: input, shape index: {}]
  %s2 = inlined_call_operand.hbm [shape: bf16[32,32], index: 2, kind: input, shape index: {}]
  %s3 = inlined_call_operand.vmem [shape: f32[1,32], index: 3, kind: input, shape index: {}]
  %s4 = inlined_call_operand.vmem [shape: f32[1,32], index: 4, kind: input, shape index: {}]
  %s5 = inlined_call_operand.vmem [shape: f32[1,32], index: 5, kind: input, shape index: {}]
  %s6 = inlined_call_operand.vmem [shape: f32[1,32], index: 6, kind: input, shape index: {}]
  %s7 = inlined_call_operand.<no memory space> [shape: f32[1,1], index: 7, kind: input, shape index: {}]
  %s8 = inlined_call_operand.hbm [shape: f32[2,32], index: 8, kind: output, shape index: {0}]
  %s9 = inlined_call_operand.vmem [shape: f32[2,1], index: 9, kind: output, shape index: {1}]
  %10 = xla_tuple %s8, %s9
  %s11 = sld [smem:[#allocation0]]
  $region62: #{tpu_custom_call.1} parent=0
    _
  %s13 = ssub.s32 1, %s11
  %s14 = scalar_select 0, %s13, %s11
  %v15 = vstv %s7
  %16 = vst [vmem:[#allocation4] sm:$0x1] %v15
  $region1: #{tpu_custom_call.1} parent=0
    #allocation5 [shape = 'u8[8192]{0}', space=vmem, size = 0x2000, scoped, tag = 'input window, operand 2, single buffered']
    #allocation6 [shape = 's32[1]{0}', space=sflag, size = 0x4, scoped, tag = 'scoped memory for tpu_custom_call.1']
    #allocation7 [shape = 's32[1]{0}', space=sflag, size = 0x4, scoped, tag = 'scoped memory for tpu_custom_call.1']
    #allocation8 [shape = 'u8[1024]{0}', space=vmem, size = 0x400, scoped, tag = 'output window, operand 0, single buffered']
    %17 = vsyncpa [#allocation6], 0
    %18 = vsyncpa [#allocation7], 0
    // Predicated region
    $region2: #{tpu_custom_call.1} parent=1 // pred_check
      _
    $region3: #{tpu_custom_call.1} parent=1 // pred_check_branch
      %20 = sbr.rel (0) target = $region5
    $region4: #{tpu_custom_call.1} parent=1 // pred_region
      _
    $region5: #{tpu_custom_call.1} parent=1 // pred_fallthru
      _
    // Predicated region
    $region6: #{tpu_custom_call.1} parent=1 // pred_check
      _
    $region7: #{tpu_custom_call.1} parent=1 // pred_check_branch
      %22 = sbr.rel (0) target = $region9
    $region8: #{tpu_custom_call.1} parent=1 // pred_region
      _
    $region9: #{tpu_custom_call.1} parent=1 // pred_fallthru
      _
    // Predicated region
    $region10: #{tpu_custom_call.1} parent=1 // pred_check
      _
    $region11: #{tpu_custom_call.1} parent=1 // pred_check_branch
      %24 = sbr.rel (0) target = $region13
    $region12: #{tpu_custom_call.1} parent=1 // pred_region
      %s26 = ssub.s32 256, 256
      %27 = vsyncadd [#allocation6], %s26
      %s28 = sshll.u32 [#allocation5], 4
      %s29 = int_to_ptr.vmem [resolvable:$true] %s28
      %34 = dma.hbm_to_vmem [thread:$0]  %s2, 256, %s29, [#allocation6], 64, 64, 4
    $region13: #{tpu_custom_call.1} parent=1 // pred_fallthru
      _
    // Predicated region
    $region14: #{tpu_custom_call.1} parent=1 // pred_check
      _
    $region15: #{tpu_custom_call.1} parent=1 // pred_check_branch
      %36 = sbr.rel (0) target = $region17
    $region16: #{tpu_custom_call.1} parent=1 // pred_region
      _
    $region17: #{tpu_custom_call.1} parent=1 // pred_fallthru
      _
    // Predicated region
    $region18: #{tpu_custom_call.1} parent=1 // pred_check
      _
    $region19: #{tpu_custom_call.1} parent=1 // pred_check_branch
      %38 = sbr.rel (0) target = $region21
    $region20: #{tpu_custom_call.1} parent=1 // pred_region
      _
    $region21: #{tpu_custom_call.1} parent=1 // pred_fallthru
      _
    // Predicated region
    $region22: #{tpu_custom_call.1} parent=1 // pred_check
      _
    $region23: #{tpu_custom_call.1} parent=1 // pred_check_branch
      %40 = sbr.rel (0) target = $region25
    $region24: #{tpu_custom_call.1} parent=1 // pred_region
      _
    $region25: #{tpu_custom_call.1} parent=1 // pred_fallthru
      _
    // Predicated region
    $region26: #{tpu_custom_call.1} parent=1 // pred_check
      _
    $region27: #{tpu_custom_call.1} parent=1 // pred_check_branch
      %42 = sbr.rel (0) target = $region29
    $region28: #{tpu_custom_call.1} parent=1 // pred_region
      _
    $region29: #{tpu_custom_call.1} parent=1 // pred_fallthru
      _
    // Predicated region
    $region30: #{tpu_custom_call.1} parent=1 // pred_check
      _
    $region31: #{tpu_custom_call.1} parent=1 // pred_check_branch
      %44 = sbr.rel (0) target = $region33
    $region32: #{tpu_custom_call.1} parent=1 // pred_region
      _
    $region33: #{tpu_custom_call.1} parent=1 // pred_fallthru
      _
    // Predicated region
    $region34: #{tpu_custom_call.1} parent=1 // pred_check
      _
    $region35: #{tpu_custom_call.1} parent=1 // pred_check_branch
      %46 = sbr.rel (0) target = $region37
    $region36: #{tpu_custom_call.1} parent=1 // pred_region
      %47 = dma.done [#allocation6], 256
    $region37: #{tpu_custom_call.1} parent=1 // pred_fallthru
      _
    %p49 = scmp.eq.s32.totalorder 0, 0
    // Predicated region
    $region38: #{tpu_custom_call.1} parent=1 // pred_check
      %p50 = pneg %p49
    $region39: #{tpu_custom_call.1} parent=1 // pred_check_branch
      %52 = sbr.rel (%p50) target = $region41
    $region40: #{tpu_custom_call.1} parent=1 // pred_region
      %vm53 = vcmask 254976
      %54 = vst.msk [vmem:[#allocation2] sm:$0x3] %vm53, 0.0
      %vm55 = vcmask 1024
      %56 = vst.msk [vmem:[#allocation3] sm:$0x3] %vm55, 0.0
    $region41: #{tpu_custom_call.1} parent=1 // pred_fallthru
      _
    %v57 = vld [vmem:[%s1] sm:$0xf]
    %v58 = vld [vmem:[%s1 + $0x4] sm:$0xf]
    %v59 = vld [vmem:[%s0] sm:$0xf]
    %v60 = vld [vmem:[%s0 + $0x4] sm:$0xf]
    %62 = vset.pattern.permute.xlu0 0
    %63 = vperm.xlu0 %62, %v57
    %v64 = vpop.permute.xlu0 %63
    %v67 = vunpack.c.l.s4 839922192
    %v68 = vunpack.c.0.s8 %v67
    %v69 = vlaneseq
    %v70 = vshrl.u32 %v69, 7
    %v71 = vsub.s32 %v68, %v70
    %v72 = vrot.slane %v64, %v71
    %74 = vset.pattern.permute.xlu0 0
    %75 = vperm.xlu0 %74, %v58
    %v76 = vpop.permute.xlu0 %75
    %v79 = vunpack.c.l.s4 839922192
    %v80 = vunpack.c.0.s8 %v79
    %v81 = vlaneseq
    %v82 = vshrl.u32 %v81, 7
    %v83 = vsub.s32 %v80, %v82
    %v84 = vrot.slane %v76, %v83
    %v85 = vmul.bf16 %v59, %v72
    %v86 = vmul.bf16 %v60, %v84
    %v87 = vld [vmem:[#allocation2] sm:$0x3]
    %v88 = vunpack.c.l.bf16 %v85
    %v89 = vunpack.c.l.bf16 %v86
    %vm90 = vcmask 261120
    %v91 = vsel %vm90, %v88, 0.0
    %v92 = vrot.slane %v91, 4
    %v93 = vadd.f32 %v91, %v92
    %v94 = vrot.slane %v93, 2
    %v95 = vadd.f32 %v93, %v94
    %v96 = vrot.slane %v95, 1
    %v97 = vadd.f32 %v95, %v96
    %v98 = vsel %vm90, %v89, 0.0
    %v99 = vrot.slane %v98, 4
    %v100 = vadd.f32 %v98, %v99
    %v101 = vrot.slane %v100, 2
    %v102 = vadd.f32 %v100, %v101
    %v103 = vrot.slane %v102, 1
    %v104 = vadd.f32 %v102, %v103
    %vm107 = vcmask 1041409
    %v108 = vsel %vm107, %v104, %v97
    %v110 = vadd.f32 %v87, %v108
    %vm111 = vcmask 254976
    %112 = vst.msk [vmem:[#allocation2] sm:$0x3] %vm111, %v110
    %v113 = vld [vmem:[#allocation3] sm:$0x3]
    %v114 = vunpack.c.l.bf16 %v57
    %v115 = vunpack.c.l.bf16 %v58
    %vm116 = vcmask 7168
    %v117 = vsel %vm116, %v114, 0.0
    %v118 = vrot.slane %v117, 4
    %v119 = vadd.f32 %v117, %v118
    %v120 = vrot.slane %v119, 2
    %v121 = vadd.f32 %v119, %v120
    %v122 = vrot.slane %v121, 1
    %v123 = vadd.f32 %v121, %v122
    %v124 = vsel %vm116, %v115, 0.0
    %v125 = vrot.slane %v124, 4
    %v126 = vadd.f32 %v124, %v125
    %v127 = vrot.slane %v126, 2
    %v128 = vadd.f32 %v126, %v127
    %v129 = vrot.slane %v128, 1
    %v130 = vadd.f32 %v128, %v129
    %v133 = vsel %vm107, %v130, %v123
    %v135 = vadd.f32 %v113, %v133
    %vm136 = vcmask 1024
    %137 = vst.msk [vmem:[#allocation3] sm:$0x3] %vm136, %v135
    // Predicated region
    $region42: #{tpu_custom_call.1} parent=1 // pred_check
      %p138 = pneg %p49
    $region43: #{tpu_custom_call.1} parent=1 // pred_check_branch
      %140 = sbr.rel (%p138) target = $region45
    $region44: #{tpu_custom_call.1} parent=1 // pred_region
      %v141 = vld [vmem:[#allocation3] sm:$0x3]
      %v142 = vmax.f32 %v141, 1e-09
      %v143 = vld [vmem:[#allocation2] sm:$0x3]
      %v144 = vrcp.pop %v142
      %146 = vset.pattern.permute.xlu0 0
      %147 = vperm.xlu0 %146, %v144
      %v148 = vpop.permute.xlu0 %147
      %v150 = vmul.f32 %v143, %v148
      %v151 = vpack.c.bf16 %v150, %v150
      %v152 = vld [vmem:[#allocation5] sm:$0xf]
      %v153 = vld [vmem:[#allocation5 + $0x4] sm:$0xf]
      %v154 = vld [vmem:[#allocation5 + $0x8] sm:$0xf]
      %v155 = vld [vmem:[#allocation5 + $0xc] sm:$0xf]
      %v156 = vld [vmem:[%s3] sm:$0x1]
      %v158 = vlaneseq
      %v159 = vshrl.u32 %v158, 7
      %v160 = vsub.s32 0, %v159
      %v161 = vrot.slane %v156, %v160
      %v167 = vunpack.c.l.b16 %v152
      %v168 = vunpack.c.l.b16 %v153
      %v169 = vunpack.c.l.b16 %v154
      %v170 = vunpack.c.l.b16 %v155
      %v171 = vpack.c.b16 %v168, %v167
      %v172 = vpack.c.b16 %v170, %v169
      %v176 = vsel %vm90, %v151, 0
      %178 = vmatprep.subr.bf16.mxu0 0
      %179 = vmatpush1.bf16.msra.mxu0 0
      %180 = vmatprep.subr.bf16.mxu0 0
      %181 = vmatpush1.bf16.msra.mxu0 0
      %182 = vmatprep.subr.bf16.mxu0 0
      %183 = vmatpush1.bf16.msra.mxu0 0
      %184 = vmatprep.subr.bf16.mxu0 0
      %185 = vmatpush1.bf16.msra.mxu0 0
      %186 = vmatprep.subr.bf16.mxu0 0
      %187 = vmatpush1.bf16.msra.mxu0 0
      %188 = vmatprep.subr.bf16.mxu0 0
      %189 = vmatpush1.bf16.msra.mxu0 0
      %190 = vmatprep.subr.bf16.mxu0 0
      %191 = vmatpush1.bf16.msra.mxu0 %v172
      %192 = vmatprep.subr.bf16.mxu0 0
      %193 = vmatpush1.bf16.msra.mxu0 %v171
      %194 = vmatprep.subr.bf16.mxu0 0
      %195 = vmatpush2.bf16.msra.mxu0 0
      %196 = vmatprep.subr.bf16.mxu0 0
      %197 = vmatpush2.bf16.msra.mxu0 0
      %198 = vmatprep.subr.bf16.mxu0 0
      %199 = vmatpush2.bf16.msra.mxu0 0
      %200 = vmatprep.subr.bf16.mxu0 0
      %201 = vmatpush2.bf16.msra.mxu0 0
      %202 = vmatprep.subr.bf16.mxu0 0
      %203 = vmatpush2.bf16.msra.mxu0 0
      %204 = vmatprep.subr.bf16.mxu0 0
      %205 = vmatpush2.bf16.msra.mxu0 0
      %206 = vmatprep.subr.bf16.mxu0 0
      %207 = vmatpush2.bf16.msra.mxu0 0
      %208 = vmatprep.subr.bf16.mxu0 0
      %209 = vmatpush2.bf16.msra.mxu0 0
      %210 = vmatprep.mubr.bf16.mxu0 0
      %211 = vmatmul.mubr.bf16.gmra.mxu0 %v176
      %v212 = vpop.f32.mrf.mxu0
      %v213 = vadd.f32 %v161, %v212
      %v214 = vpop.f32.mrf.mxu0
      %v215 = vpop.f32.mrf.mxu0
      %v216 = vpop.f32.mrf.mxu0
      %217 = vdwg.mxu0
      %v218 = vmul.f32 %v213, 0.5
      %v219 = vmul.f32 %v213, 0.70710677
      %v220 = verf.f32.pop %v219
      %v221 = vadd.f32 %v220, 1.0
      %v222 = vmul.f32 %v218, %v221
      %v223 = vsel %vm111, %v222, 0.0
      %224 = vadd.xlane.f32.xlu0 %v223
      %v225 = vpop.xlane.xlu0 %224
      %v226 = vrcp.pop 32.0
      %v227 = vmul.f32 %v225, %v226
      %v228 = vsub.f32 %v222, %v227
      %v229 = vmul.f32 %v228, %v228
      %v230 = vsel %vm111, %v229, 0.0
      %231 = vadd.xlane.f32.xlu0 %v230
      %v232 = vpop.xlane.xlu0 %231
      %v233 = vmul.f32 %v232, %v226
      %v234 = vadd.f32 %v233, 1e-12
      %v235 = vrsqrt.pop %v234
      %v236 = vmul.f32 %v228, %v235
      %v237 = vld [vmem:[%s4] sm:$0x1]
      %v239 = vlaneseq
      %v240 = vshrl.u32 %v239, 7
      %v241 = vsub.s32 0, %v240
      %v242 = vrot.slane %v237, %v241
      %v244 = vmul.f32 %v236, %v242
      %v245 = vld [vmem:[%s5] sm:$0x1]
      %v247 = vlaneseq
      %v248 = vshrl.u32 %v247, 7
      %v249 = vsub.s32 0, %v248
      %v250 = vrot.slane %v245, %v249
      %v252 = vadd.f32 %v244, %v250
      %253 = vst.msk [vmem:[#allocation8] sm:$0x3] %vm111, %v252
      %v254 = vld [vmem:[%s6] sm:$0x1]
      %v256 = vlaneseq
      %v257 = vshrl.u32 %v256, 7
      %v258 = vsub.s32 0, %v257
      %v259 = vrot.slane %v254, %v258
      %v261 = vmul.f32 %v252, %v259
      %v262 = vsel %vm111, %v261, 0.0
      %263 = vadd.xlane.f32.xlu0 %v262
      %v264 = vpop.xlane.xlu0 %263
      %v265 = vld [vmem:[#allocation4] sm:$0x1]
      %v267 = vlaneseq
      %v268 = vshrl.u32 %v267, 7
      %v269 = vsub.s32 0, %v268
      %v270 = vrot.slane %v265, %v269
      %v272 = vadd.f32 %v264, %v270
      %273 = vst.msk [vmem:[%s9] sm:$0x3] %vm136, %v272
    $region45: #{tpu_custom_call.1} parent=1 // pred_fallthru
      _
    // Predicated region
    $region46: #{tpu_custom_call.1} parent=1 // pred_check
      _
    $region47: #{tpu_custom_call.1} parent=1 // pred_check_branch
      %275 = sbr.rel (0) target = $region49
    $region48: #{tpu_custom_call.1} parent=1 // pred_region
      %s277 = ssub.s32 32, 32
      %278 = vsyncadd [#allocation7], %s277
      %s280 = sshll.u32 [#allocation8], 4
      %s281 = int_to_ptr.vmem [resolvable:$true] %s280
      %283 = dma.vmem_to_hbm [thread:$0]  %s281, 32, %s8, [#allocation7]
    $region49: #{tpu_custom_call.1} parent=1 // pred_fallthru
      _
    // Predicated region
    $region50: #{tpu_custom_call.1} parent=1 // pred_check
      _
    $region51: #{tpu_custom_call.1} parent=1 // pred_check_branch
      %285 = sbr.rel (0) target = $region53
    $region52: #{tpu_custom_call.1} parent=1 // pred_region
      _
    $region53: #{tpu_custom_call.1} parent=1 // pred_fallthru
      _
    // Predicated region
    $region54: #{tpu_custom_call.1} parent=1 // pred_check
      _
    $region55: #{tpu_custom_call.1} parent=1 // pred_check_branch
      %287 = sbr.rel (0) target = $region57
    $region56: #{tpu_custom_call.1} parent=1 // pred_region
      %288 = dma.done [#allocation7], 32
    $region57: #{tpu_custom_call.1} parent=1 // pred_fallthru
      _
    // Predicated region
    $region58: #{tpu_custom_call.1} parent=1 // pred_check
      _
    $region59: #{tpu_custom_call.1} parent=1 // pred_check_branch
      %290 = sbr.rel (0) target = $region61
    $region60: #{tpu_custom_call.1} parent=1 // pred_region
      _
    $region61: #{tpu_custom_call.1} parent=1 // pred_fallthru
      _
    %291 = vsyncpa [#allocation6], 1
    %292 = vsyncpa [#allocation7], 1

</llo_original>
